<compile_context>
chip_gen: v7x
topology: tpu7x:2x2x1
jax: 0.10.0
libtpu: 0.0.40
codegen_flags: <defaults>
</compile_context>

<pallas_src>
import functools

import jax
import jax.numpy as jnp
from jax.experimental import pallas as pl
from jax.experimental.pallas import tpu as pltpu

_LANE = 128
_SUBLANE = 8


def _round_up(v, m):
    return (v + m - 1) // m * m


def _ae_kernel(x_ref,
               w1_ref, b1_ref, w2_ref, b2_ref, w3_ref, b3_ref,
               w4_ref, b4_ref, w5_ref, b5_ref, w6_ref, b6_ref,
               o_ref):
    act_dtype = w1_ref.dtype  # bf16 intermediates when weights are bf16

    def linear(h, w_ref, b_ref):
        # MXU matmul in the weight dtype with f32 accumulation; bias in f32.
        return jnp.dot(h.astype(w_ref.dtype), w_ref[...],
                       preferred_element_type=jnp.float32) + b_ref[...]

    def relu(h):
        # Compare/select in f32 (v5e has no bf16 VALU), then store the
        # inter-layer activation at half width.
        return jnp.maximum(h, 0.0).astype(act_dtype)

    h = x_ref[...]
    # Encoder: Linear(in,128) ReLU, Linear(128,64) ReLU, Linear(64,enc) ReLU
    h = relu(linear(h, w1_ref, b1_ref))
    h = relu(linear(h, w2_ref, b2_ref))
    h = relu(linear(h, w3_ref, b3_ref))
    # Decoder: Linear(enc,64) ReLU, Linear(64,128) ReLU, Linear(128,in) Sigmoid
    h = relu(linear(h, w4_ref, b4_ref))
    h = relu(linear(h, w5_ref, b5_ref))
    z = linear(h, w6_ref, b6_ref)
    # Sigmoid: exp and approx reciprocal both run on the EUP.
    o_ref[...] = pl.reciprocal(1.0 + jnp.exp(-z), approx=True).astype(o_ref.dtype)


def prepare_params(params, *, use_bf16=True):
    """One-time preprocessing (hoisted out of the forward pass).

    Pads internal hidden dims to multiples of 128 (exact: padded rows/cols are
    zero) and casts weights to bf16.  The first layer's input dim and the last
    layer's output dim are left unpadded so they match the unpadded x / out
    arrays.  Returns a flat list [W1, b1, ..., W6, b6]."""
    w_dtype = jnp.bfloat16 if use_bf16 else jnp.float32
    n = len(params)
    flat = []
    for idx, (W, b) in enumerate(params):
        d_i, d_o = W.shape
        d_i_p = d_i if idx == 0 else _round_up(d_i, _LANE)
        d_o_p = d_o if idx == n - 1 else _round_up(d_o, _LANE)
        Wp = jnp.pad(W, ((0, d_i_p - d_i), (0, d_o_p - d_o))).astype(w_dtype)
        bp = jnp.pad(b.reshape(1, -1).astype(jnp.float32),
                     ((0, 0), (0, d_o_p - d_o)))
        flat += [Wp, bp]
    return flat


@functools.partial(jax.jit, static_argnames=("tile_b",))
def linear_ae_forward(x, flat_params, tile_b=1024):
    """x: [B, input_dim].  flat_params: output of prepare_params()."""
    B, D_in = x.shape
    D_out = flat_params[-2].shape[1]  # last layer's (unpadded) output dim

    # Batch tile: clamp to the batch (rounded to a sublane multiple) so small
    # batches are a single grid step.  No host-side batch padding: the partial
    # last block is handled by Pallas (reads of OOB rows are harmless because
    # batch rows are independent; their writes are masked).
    tile_b = max(_SUBLANE, _round_up(min(tile_b, B), _SUBLANE))
    grid = (pl.cdiv(B, tile_b),)

    # Weights/biases: whole (small) arrays, resident every grid step.
    weight_specs = [pl.BlockSpec(a.shape, lambda i: (0, 0)) for a in flat_params]

    return pl.pallas_call(
        _ae_kernel,
        out_shape=jax.ShapeDtypeStruct((B, D_out), x.dtype),
        grid_spec=pltpu.PrefetchScalarGridSpec(
            num_scalar_prefetch=0,
            grid=grid,
            in_specs=[pl.BlockSpec((tile_b, D_in), lambda i: (i, 0))]
                     + weight_specs,
            out_specs=pl.BlockSpec((tile_b, D_out), lambda i: (i, 0)),
        ),
        compiler_params=pltpu.CompilerParams(
            dimension_semantics=("parallel",),
            vmem_limit_bytes=32 * 1024 * 1024,
        ),
    )(x, *flat_params)


def init_params(key, input_dim, encoding_dim):
    """Deterministic init matching the layer shapes of Linear_AE."""
    dims = [(input_dim, 128), (128, 64), (64, encoding_dim),   # encoder
            (encoding_dim, 64), (64, 128), (128, input_dim)]   # decoder
    params = []
    for (d_in, d_out) in dims:
        key, kw, kb = jax.random.split(key, 3)
        bound = 1.0 / jnp.sqrt(d_in)
        W = jax.random.uniform(kw, (d_in, d_out), jnp.float32, -bound, bound)
        b = jax.random.uniform(kb, (d_out,), jnp.float32, -bound, bound)
        params.append((W, b))
    return params


def reference_forward(x, params):
    h = x
    for i, (W, b) in enumerate(params):
        h = h @ W + b
        if i < 5:
            h = jnp.maximum(h, 0.0)
        else:
            h = jax.nn.sigmoid(h)
    return h


if __name__ == "__main__":
    input_dim = 256
    encoding_dim = 32

    key = jax.random.PRNGKey(0)
    kx, kp, kx2 = jax.random.split(key, 3)
    params = init_params(kp, input_dim, encoding_dim)
    flat = prepare_params(params)  # pad / cast weights once, outside the forward

    # Small batch: single grid step, exactly tile-sized block.
    x = jax.random.normal(kx, (8, input_dim), jnp.float32)
    out = jax.block_until_ready(linear_ae_forward(x, flat))
    ref = reference_forward(x, params)
    assert out.shape == x.shape
    # bf16 MXU operands + approx-reciprocal sigmoid => relaxed tolerance.
    assert jnp.allclose(out, ref, atol=2e-2, rtol=2e-2), "mismatch vs reference (small)"

    # Ragged, larger batch with an explicit 512-row tile: exercises the
    # multi-step grid and the masked partial last block (no host-side pad,
    # no output slice).
    x2 = jax.random.normal(kx2, (1000, input_dim), jnp.float32)
    out2 = jax.block_until_ready(linear_ae_forward(x2, flat, tile_b=512))
    ref2 = reference_forward(x2, params)
    assert out2.shape == x2.shape
    assert jnp.allclose(out2, ref2, atol=2e-2, rtol=2e-2), "mismatch vs reference (large)"

    print("KERNEL_OK")
</pallas_src>

<mosaic_0001>
module attributes {stable_mosaic.version = 11 : i64} {
  func.func @_ae_kernel(%arg0: i32, %arg1: memref<8x256xf32, #tpu.memory_space<vmem>>, %arg2: memref<256x128xbf16, #tpu.memory_space<vmem>>, %arg3: memref<1x128xf32, #tpu.memory_space<vmem>>, %arg4: memref<128x128xbf16, #tpu.memory_space<vmem>>, %arg5: memref<1x128xf32, #tpu.memory_space<vmem>>, %arg6: memref<128x128xbf16, #tpu.memory_space<vmem>>, %arg7: memref<1x128xf32, #tpu.memory_space<vmem>>, %arg8: memref<128x128xbf16, #tpu.memory_space<vmem>>, %arg9: memref<1x128xf32, #tpu.memory_space<vmem>>, %arg10: memref<128x128xbf16, #tpu.memory_space<vmem>>, %arg11: memref<1x128xf32, #tpu.memory_space<vmem>>, %arg12: memref<128x256xbf16, #tpu.memory_space<vmem>>, %arg13: memref<1x256xf32, #tpu.memory_space<vmem>>, %arg14: memref<8x256xf32, #tpu.memory_space<vmem>>) attributes {dimension_semantics = [#tpu.dimension_semantics<parallel>], iteration_bounds = array<i64: 1>, scalar_prefetch = 0 : i64, scratch_operands = 0 : i64, tpu.core_type = #tpu.core_type<tc>, window_params = [{transform_indices = @transform_0, window_bounds = array<i64: 8, 256>}, {pipeline_mode = #tpu.pipeline_mode<synchronous>, transform_indices = @transform_1, window_bounds = array<i64: 256, 128>}, {pipeline_mode = #tpu.pipeline_mode<synchronous>, transform_indices = @transform_2, window_bounds = array<i64: 1, 128>}, {pipeline_mode = #tpu.pipeline_mode<synchronous>, transform_indices = @transform_3, window_bounds = array<i64: 128, 128>}, {pipeline_mode = #tpu.pipeline_mode<synchronous>, transform_indices = @transform_4, window_bounds = array<i64: 1, 128>}, {pipeline_mode = #tpu.pipeline_mode<synchronous>, transform_indices = @transform_5, window_bounds = array<i64: 128, 128>}, {pipeline_mode = #tpu.pipeline_mode<synchronous>, transform_indices = @transform_6, window_bounds = array<i64: 1, 128>}, {pipeline_mode = #tpu.pipeline_mode<synchronous>, transform_indices = @transform_7, window_bounds = array<i64: 128, 128>}, {pipeline_mode = #tpu.pipeline_mode<synchronous>, transform_indices = @transform_8, window_bounds = array<i64: 1, 128>}, {pipeline_mode = #tpu.pipeline_mode<synchronous>, transform_indices = @transform_9, window_bounds = array<i64: 128, 128>}, {pipeline_mode = #tpu.pipeline_mode<synchronous>, transform_indices = @transform_10, window_bounds = array<i64: 1, 128>}, {pipeline_mode = #tpu.pipeline_mode<synchronous>, transform_indices = @transform_11, window_bounds = array<i64: 128, 256>}, {pipeline_mode = #tpu.pipeline_mode<synchronous>, transform_indices = @transform_12, window_bounds = array<i64: 1, 256>}, {transform_indices = @transform_13, window_bounds = array<i64: 8, 256>}]} {
    %c0 = arith.constant 0 : index
    %c0_0 = arith.constant 0 : index
    %0 = vector.load %arg1[%c0, %c0_0] : memref<8x256xf32, #tpu.memory_space<vmem>>, vector<8x256xf32>
    %1 = arith.truncf %0 : vector<8x256xf32> to vector<8x256xbf16>
    %c0_1 = arith.constant 0 : index
    %c0_2 = arith.constant 0 : index
    %2 = vector.load %arg2[%c0_1, %c0_2] : memref<256x128xbf16, #tpu.memory_space<vmem>>, vector<256x128xbf16>
    %cst = arith.constant dense<0.000000e+00> : vector<8x128xf32>
    %3 = tpu.matmul %1, %2, %cst {dimension_numbers = #tpu.dot_dimension_numbers<[1], [0], [0], [1], [0, 0, 1, 1], [], []>} : vector<8x256xbf16>, vector<256x128xbf16>, vector<8x128xf32> -> vector<8x128xf32>
    %c0_3 = arith.constant 0 : index
    %c0_4 = arith.constant 0 : index
    %4 = vector.load %arg3[%c0_3, %c0_4] : memref<1x128xf32, #tpu.memory_space<vmem>>, vector<1x128xf32>
    %5 = vector.broadcast %4 : vector<1x128xf32> to vector<8x128xf32>
    %6 = arith.addf %3, %5 : vector<8x128xf32>
    %cst_5 = arith.constant 0.000000e+00 : f32
    %7 = vector.broadcast %cst_5 : f32 to vector<8x128xf32>
    %8 = arith.maximumf %6, %7 : vector<8x128xf32>
    %9 = arith.truncf %8 : vector<8x128xf32> to vector<8x128xbf16>
    %c0_6 = arith.constant 0 : index
    %c0_7 = arith.constant 0 : index
    %10 = vector.load %arg4[%c0_6, %c0_7] : memref<128x128xbf16, #tpu.memory_space<vmem>>, vector<128x128xbf16>
    %cst_8 = arith.constant dense<0.000000e+00> : vector<8x128xf32>
    %11 = tpu.matmul %9, %10, %cst_8 {dimension_numbers = #tpu.dot_dimension_numbers<[1], [0], [0], [1], [0, 0, 1, 1], [], []>} : vector<8x128xbf16>, vector<128x128xbf16>, vector<8x128xf32> -> vector<8x128xf32>
    %c0_9 = arith.constant 0 : index
    %c0_10 = arith.constant 0 : index
    %12 = vector.load %arg5[%c0_9, %c0_10] : memref<1x128xf32, #tpu.memory_space<vmem>>, vector<1x128xf32>
    %13 = vector.broadcast %12 : vector<1x128xf32> to vector<8x128xf32>
    %14 = arith.addf %11, %13 : vector<8x128xf32>
    %cst_11 = arith.constant 0.000000e+00 : f32
    %15 = vector.broadcast %cst_11 : f32 to vector<8x128xf32>
    %16 = arith.maximumf %14, %15 : vector<8x128xf32>
    %17 = arith.truncf %16 : vector<8x128xf32> to vector<8x128xbf16>
    %c0_12 = arith.constant 0 : index
    %c0_13 = arith.constant 0 : index
    %18 = vector.load %arg6[%c0_12, %c0_13] : memref<128x128xbf16, #tpu.memory_space<vmem>>, vector<128x128xbf16>
    %cst_14 = arith.constant dense<0.000000e+00> : vector<8x128xf32>
    %19 = tpu.matmul %17, %18, %cst_14 {dimension_numbers = #tpu.dot_dimension_numbers<[1], [0], [0], [1], [0, 0, 1, 1], [], []>} : vector<8x128xbf16>, vector<128x128xbf16>, vector<8x128xf32> -> vector<8x128xf32>
    %c0_15 = arith.constant 0 : index
    %c0_16 = arith.constant 0 : index
    %20 = vector.load %arg7[%c0_15, %c0_16] : memref<1x128xf32, #tpu.memory_space<vmem>>, vector<1x128xf32>
    %21 = vector.broadcast %20 : vector<1x128xf32> to vector<8x128xf32>
    %22 = arith.addf %19, %21 : vector<8x128xf32>
    %cst_17 = arith.constant 0.000000e+00 : f32
    %23 = vector.broadcast %cst_17 : f32 to vector<8x128xf32>
    %24 = arith.maximumf %22, %23 : vector<8x128xf32>
    %25 = arith.truncf %24 : vector<8x128xf32> to vector<8x128xbf16>
    %c0_18 = arith.constant 0 : index
    %c0_19 = arith.constant 0 : index
    %26 = vector.load %arg8[%c0_18, %c0_19] : memref<128x128xbf16, #tpu.memory_space<vmem>>, vector<128x128xbf16>
    %cst_20 = arith.constant dense<0.000000e+00> : vector<8x128xf32>
    %27 = tpu.matmul %25, %26, %cst_20 {dimension_numbers = #tpu.dot_dimension_numbers<[1], [0], [0], [1], [0, 0, 1, 1], [], []>} : vector<8x128xbf16>, vector<128x128xbf16>, vector<8x128xf32> -> vector<8x128xf32>
    %c0_21 = arith.constant 0 : index
    %c0_22 = arith.constant 0 : index
    %28 = vector.load %arg9[%c0_21, %c0_22] : memref<1x128xf32, #tpu.memory_space<vmem>>, vector<1x128xf32>
    %29 = vector.broadcast %28 : vector<1x128xf32> to vector<8x128xf32>
    %30 = arith.addf %27, %29 : vector<8x128xf32>
    %cst_23 = arith.constant 0.000000e+00 : f32
    %31 = vector.broadcast %cst_23 : f32 to vector<8x128xf32>
    %32 = arith.maximumf %30, %31 : vector<8x128xf32>
    %33 = arith.truncf %32 : vector<8x128xf32> to vector<8x128xbf16>
    %c0_24 = arith.constant 0 : index
    %c0_25 = arith.constant 0 : index
    %34 = vector.load %arg10[%c0_24, %c0_25] : memref<128x128xbf16, #tpu.memory_space<vmem>>, vector<128x128xbf16>
    %cst_26 = arith.constant dense<0.000000e+00> : vector<8x128xf32>
    %35 = tpu.matmul %33, %34, %cst_26 {dimension_numbers = #tpu.dot_dimension_numbers<[1], [0], [0], [1], [0, 0, 1, 1], [], []>} : vector<8x128xbf16>, vector<128x128xbf16>, vector<8x128xf32> -> vector<8x128xf32>
    %c0_27 = arith.constant 0 : index
    %c0_28 = arith.constant 0 : index
    %36 = vector.load %arg11[%c0_27, %c0_28] : memref<1x128xf32, #tpu.memory_space<vmem>>, vector<1x128xf32>
    %37 = vector.broadcast %36 : vector<1x128xf32> to vector<8x128xf32>
    %38 = arith.addf %35, %37 : vector<8x128xf32>
    %cst_29 = arith.constant 0.000000e+00 : f32
    %39 = vector.broadcast %cst_29 : f32 to vector<8x128xf32>
    %40 = arith.maximumf %38, %39 : vector<8x128xf32>
    %41 = arith.truncf %40 : vector<8x128xf32> to vector<8x128xbf16>
    %c0_30 = arith.constant 0 : index
    %c0_31 = arith.constant 0 : index
    %42 = vector.load %arg12[%c0_30, %c0_31] : memref<128x256xbf16, #tpu.memory_space<vmem>>, vector<128x256xbf16>
    %cst_32 = arith.constant dense<0.000000e+00> : vector<8x256xf32>
    %43 = tpu.matmul %41, %42, %cst_32 {dimension_numbers = #tpu.dot_dimension_numbers<[1], [0], [0], [1], [0, 0, 1, 1], [], []>} : vector<8x128xbf16>, vector<128x256xbf16>, vector<8x256xf32> -> vector<8x256xf32>
    %c0_33 = arith.constant 0 : index
    %c0_34 = arith.constant 0 : index
    %44 = vector.load %arg13[%c0_33, %c0_34] : memref<1x256xf32, #tpu.memory_space<vmem>>, vector<1x256xf32>
    %45 = vector.broadcast %44 : vector<1x256xf32> to vector<8x256xf32>
    %46 = arith.addf %43, %45 : vector<8x256xf32>
    %cst_35 = arith.constant 0.000000e+00 : f32
    %47 = vector.broadcast %cst_35 : f32 to vector<8x256xf32>
    %48 = arith.subf %47, %46 : vector<8x256xf32>
    %49 = math.exp %48 : vector<8x256xf32>
    %cst_36 = arith.constant 1.000000e+00 : f32
    %50 = vector.broadcast %cst_36 : f32 to vector<8x256xf32>
    %51 = arith.addf %50, %49 : vector<8x256xf32>
    %52 = tpu.reciprocal %51 {approx = true} : vector<8x256xf32> -> vector<8x256xf32>
    %c0_37 = arith.constant 0 : index
    %c0_38 = arith.constant 0 : index
    %53 = vector.load %arg14[%c0_37, %c0_38] : memref<8x256xf32, #tpu.memory_space<vmem>>, vector<8x256xf32>
    tpu.vector_store %arg14[%c0_37, %c0_38], %52 {strides = array<i32>} : memref<8x256xf32, #tpu.memory_space<vmem>>, vector<8x256xf32>,
    return
  }
  func.func @transform_0(%arg0: i32) -> (i32, i32) {
    %c0_i32 = arith.constant 0 : i32
    %c0_i32_0 = arith.constant 0 : i32
    return %arg0, %c0_i32 : i32, i32
  }
  func.func @transform_1(%arg0: i32) -> (i32, i32) {
    %c0_i32 = arith.constant 0 : i32
    %c0_i32_0 = arith.constant 0 : i32
    %c0_i32_1 = arith.constant 0 : i32
    return %c0_i32, %c0_i32_0 : i32, i32
  }
  func.func @transform_2(%arg0: i32) -> (i32, i32) {
    %c0_i32 = arith.constant 0 : i32
    %c0_i32_0 = arith.constant 0 : i32
    %c0_i32_1 = arith.constant 0 : i32
    return %c0_i32, %c0_i32_0 : i32, i32
  }
  func.func @transform_3(%arg0: i32) -> (i32, i32) {
    %c0_i32 = arith.constant 0 : i32
    %c0_i32_0 = arith.constant 0 : i32
    %c0_i32_1 = arith.constant 0 : i32
    return %c0_i32, %c0_i32_0 : i32, i32
  }
  func.func @transform_4(%arg0: i32) -> (i32, i32) {
    %c0_i32 = arith.constant 0 : i32
    %c0_i32_0 = arith.constant 0 : i32
    %c0_i32_1 = arith.constant 0 : i32
    return %c0_i32, %c0_i32_0 : i32, i32
  }
  func.func @transform_5(%arg0: i32) -> (i32, i32) {
    %c0_i32 = arith.constant 0 : i32
    %c0_i32_0 = arith.constant 0 : i32
    %c0_i32_1 = arith.constant 0 : i32
    return %c0_i32, %c0_i32_0 : i32, i32
  }
  func.func @transform_6(%arg0: i32) -> (i32, i32) {
    %c0_i32 = arith.constant 0 : i32
    %c0_i32_0 = arith.constant 0 : i32
    %c0_i32_1 = arith.constant 0 : i32
    return %c0_i32, %c0_i32_0 : i32, i32
  }
  func.func @transform_7(%arg0: i32) -> (i32, i32) {
    %c0_i32 = arith.constant 0 : i32
    %c0_i32_0 = arith.constant 0 : i32
    %c0_i32_1 = arith.constant 0 : i32
    return %c0_i32, %c0_i32_0 : i32, i32
  }
  func.func @transform_8(%arg0: i32) -> (i32, i32) {
    %c0_i32 = arith.constant 0 : i32
    %c0_i32_0 = arith.constant 0 : i32
    %c0_i32_1 = arith.constant 0 : i32
    return %c0_i32, %c0_i32_0 : i32, i32
  }
  func.func @transform_9(%arg0: i32) -> (i32, i32) {
    %c0_i32 = arith.constant 0 : i32
    %c0_i32_0 = arith.constant 0 : i32
    %c0_i32_1 = arith.constant 0 : i32
    return %c0_i32, %c0_i32_0 : i32, i32
  }
  func.func @transform_10(%arg0: i32) -> (i32, i32) {
    %c0_i32 = arith.constant 0 : i32
    %c0_i32_0 = arith.constant 0 : i32
    %c0_i32_1 = arith.constant 0 : i32
    return %c0_i32, %c0_i32_0 : i32, i32
  }
  func.func @transform_11(%arg0: i32) -> (i32, i32) {
    %c0_i32 = arith.constant 0 : i32
    %c0_i32_0 = arith.constant 0 : i32
    %c0_i32_1 = arith.constant 0 : i32
    return %c0_i32, %c0_i32_0 : i32, i32
  }
  func.func @transform_12(%arg0: i32) -> (i32, i32) {
    %c0_i32 = arith.constant 0 : i32
    %c0_i32_0 = arith.constant 0 : i32
    %c0_i32_1 = arith.constant 0 : i32
    return %c0_i32, %c0_i32_0 : i32, i32
  }
  func.func @transform_13(%arg0: i32) -> (i32, i32) {
    %c0_i32 = arith.constant 0 : i32
    %c0_i32_0 = arith.constant 0 : i32
    return %arg0, %c0_i32 : i32, i32
  }
}

</mosaic_0001>

<llo_original>
// kernel: linear_ae_forward.1
$region0: #{linear_ae_forward.1}
  #allocation0 [shape = 'u32[]', space=smem, size = 0x4, offset = 0x4, fixed_abs, tag = 'smem constant byte address 0x4 - core index']
  #allocation1 [shape = 'u32[144,128]{1,0:T(1,128)}', space=vmem, size = 0x12000, scoped, tag = 'internal scratch']
  %s0 = inlined_call_operand.hbm [shape: f32[8,256], index: 0, kind: input, shape index: {}]
  %s1 = inlined_call_operand.hbm [shape: bf16[256,128], index: 1, kind: input, shape index: {}]
  %s2 = inlined_call_operand.vmem [shape: f32[1,128], index: 2, kind: input, shape index: {}]
  %s3 = inlined_call_operand.hbm [shape: bf16[128,128], index: 3, kind: input, shape index: {}]
  %s4 = inlined_call_operand.vmem [shape: f32[1,128], index: 4, kind: input, shape index: {}]
  %s5 = inlined_call_operand.hbm [shape: bf16[128,128], index: 5, kind: input, shape index: {}]
  %s6 = inlined_call_operand.vmem [shape: f32[1,128], index: 6, kind: input, shape index: {}]
  %s7 = inlined_call_operand.hbm [shape: bf16[128,128], index: 7, kind: input, shape index: {}]
  %s8 = inlined_call_operand.vmem [shape: f32[1,128], index: 8, kind: input, shape index: {}]
  %s9 = inlined_call_operand.hbm [shape: bf16[128,128], index: 9, kind: input, shape index: {}]
  %s10 = inlined_call_operand.vmem [shape: f32[1,128], index: 10, kind: input, shape index: {}]
  %s11 = inlined_call_operand.hbm [shape: bf16[128,256], index: 11, kind: input, shape index: {}]
  %s12 = inlined_call_operand.vmem [shape: f32[1,256], index: 12, kind: input, shape index: {}]
  %s13 = inlined_call_operand.hbm [shape: f32[8,256], index: 13, kind: output, shape index: {}]
  %s14 = sld [smem:[#allocation0]]
  $region90: #{linear_ae_forward.1} parent=0
    _
  %s16 = ssub.s32 1, %s14
  %s17 = scalar_select 0, %s16, %s14
  $region1: #{linear_ae_forward.1} parent=0
    #allocation2 [shape = 'u8[8192]{0}', space=vmem, size = 0x2000, scoped, tag = 'input window, operand 0, single buffered']
    #allocation3 [shape = 's32[1]{0}', space=sflag, size = 0x4, scoped, tag = 'scoped memory for linear_ae_forward.1']
    #allocation4 [shape = 's32[1]{0}', space=sflag, size = 0x4, scoped, tag = 'scoped memory for linear_ae_forward.1']
    #allocation5 [shape = 'u8[65536]{0}', space=vmem, size = 0x10000, scoped, tag = 'input window, operand 1, single buffered']
    #allocation6 [shape = 's32[1]{0}', space=sflag, size = 0x4, scoped, tag = 'scoped memory for linear_ae_forward.1']
    #allocation7 [shape = 'u8[32768]{0}', space=vmem, size = 0x8000, scoped, tag = 'input window, operand 3, single buffered']
    #allocation8 [shape = 'u8[32768]{0}', space=vmem, size = 0x8000, scoped, tag = 'input window, operand 5, single buffered']
    #allocation9 [shape = 's32[1]{0}', space=sflag, size = 0x4, scoped, tag = 'scoped memory for linear_ae_forward.1']
    #allocation10 [shape = 'u8[32768]{0}', space=vmem, size = 0x8000, scoped, tag = 'input window, operand 7, single buffered']
    #allocation11 [shape = 'u8[32768]{0}', space=vmem, size = 0x8000, scoped, tag = 'input window, operand 9, single buffered']
    #allocation12 [shape = 's32[1]{0}', space=sflag, size = 0x4, scoped, tag = 'scoped memory for linear_ae_forward.1']
    #allocation13 [shape = 'u8[65536]{0}', space=vmem, size = 0x10000, scoped, tag = 'input window, operand 11, single buffered']
    #allocation14 [shape = 'u8[8192]{0}', space=vmem, size = 0x2000, scoped, tag = 'output window, operand 0, single buffered']
    %18 = vsyncpa [#allocation3], 0
    %19 = vsyncpa [#allocation6], 0
    %20 = vsyncpa [#allocation9], 0
    %21 = vsyncpa [#allocation12], 0
    %22 = vsyncpa [#allocation4], 0
    // Predicated region
    $region2: #{linear_ae_forward.1} parent=1 // pred_check
      _
    $region3: #{linear_ae_forward.1} parent=1 // pred_check_branch
      %24 = sbr.rel (0) target = $region5
    $region4: #{linear_ae_forward.1} parent=1 // pred_region
      %s26 = ssub.s32 256, 256
      %27 = vsyncadd [#allocation3], %s26
      %s29 = sshll.u32 [#allocation2], 4
      %s30 = int_to_ptr.vmem [resolvable:$true] %s29
      %32 = dma.hbm_to_vmem [thread:$0]  %s0, 256, %s30, [#allocation3]
    $region5: #{linear_ae_forward.1} parent=1 // pred_fallthru
      _
    // Predicated region
    $region6: #{linear_ae_forward.1} parent=1 // pred_check
      _
    $region7: #{linear_ae_forward.1} parent=1 // pred_check_branch
      %34 = sbr.rel (0) target = $region9
    $region8: #{linear_ae_forward.1} parent=1 // pred_region
      %s36 = ssub.s32 2048, 2048
      %37 = vsyncadd [#allocation6], %s36
      %s38 = sshll.u32 [#allocation5], 4
      %s39 = int_to_ptr.vmem [resolvable:$true] %s38
      %44 = dma.hbm_to_vmem [thread:$0]  %s1, 2048, %s39, [#allocation6], 64, 64, 4
    $region9: #{linear_ae_forward.1} parent=1 // pred_fallthru
      _
    // Predicated region
    $region10: #{linear_ae_forward.1} parent=1 // pred_check
      _
    $region11: #{linear_ae_forward.1} parent=1 // pred_check_branch
      %46 = sbr.rel (0) target = $region13
    $region12: #{linear_ae_forward.1} parent=1 // pred_region
      _
    $region13: #{linear_ae_forward.1} parent=1 // pred_fallthru
      _
    // Predicated region
    $region14: #{linear_ae_forward.1} parent=1 // pred_check
      _
    $region15: #{linear_ae_forward.1} parent=1 // pred_check_branch
      %48 = sbr.rel (0) target = $region17
    $region16: #{linear_ae_forward.1} parent=1 // pred_region
      %s50 = ssub.s32 1024, 1024
      %51 = vsyncadd [#allocation6], %s50
      %s52 = sshll.u32 [#allocation7], 4
      %s53 = int_to_ptr.vmem [resolvable:$true] %s52
      %58 = dma.hbm_to_vmem [thread:$0]  %s3, 1024, %s53, [#allocation6], 64, 64, 4
    $region17: #{linear_ae_forward.1} parent=1 // pred_fallthru
      _
    // Predicated region
    $region18: #{linear_ae_forward.1} parent=1 // pred_check
      _
    $region19: #{linear_ae_forward.1} parent=1 // pred_check_branch
      %60 = sbr.rel (0) target = $region21
    $region20: #{linear_ae_forward.1} parent=1 // pred_region
      _
    $region21: #{linear_ae_forward.1} parent=1 // pred_fallthru
      _
    // Predicated region
    $region22: #{linear_ae_forward.1} parent=1 // pred_check
      _
    $region23: #{linear_ae_forward.1} parent=1 // pred_check_branch
      %62 = sbr.rel (0) target = $region25
    $region24: #{linear_ae_forward.1} parent=1 // pred_region
      %s64 = ssub.s32 1024, 1024
      %65 = vsyncadd [#allocation9], %s64
      %s66 = sshll.u32 [#allocation8], 4
      %s67 = int_to_ptr.vmem [resolvable:$true] %s66
      %72 = dma.hbm_to_vmem [thread:$0]  %s5, 1024, %s67, [#allocation9], 64, 64, 4
    $region25: #{linear_ae_forward.1} parent=1 // pred_fallthru
      _
    // Predicated region
    $region26: #{linear_ae_forward.1} parent=1 // pred_check
      _
    $region27: #{linear_ae_forward.1} parent=1 // pred_check_branch
      %74 = sbr.rel (0) target = $region29
    $region28: #{linear_ae_forward.1} parent=1 // pred_region
      _
    $region29: #{linear_ae_forward.1} parent=1 // pred_fallthru
      _
    // Predicated region
    $region30: #{linear_ae_forward.1} parent=1 // pred_check
      _
    $region31: #{linear_ae_forward.1} parent=1 // pred_check_branch
      %76 = sbr.rel (0) target = $region33
    $region32: #{linear_ae_forward.1} parent=1 // pred_region
      %s78 = ssub.s32 1024, 1024
      %79 = vsyncadd [#allocation9], %s78
      %s80 = sshll.u32 [#allocation10], 4
      %s81 = int_to_ptr.vmem [resolvable:$true] %s80
      %86 = dma.hbm_to_vmem [thread:$0]  %s7, 1024, %s81, [#allocation9], 64, 64, 4
    $region33: #{linear_ae_forward.1} parent=1 // pred_fallthru
      _
    // Predicated region
    $region34: #{linear_ae_forward.1} parent=1 // pred_check
      _
    $region35: #{linear_ae_forward.1} parent=1 // pred_check_branch
      %88 = sbr.rel (0) target = $region37
    $region36: #{linear_ae_forward.1} parent=1 // pred_region
      _
    $region37: #{linear_ae_forward.1} parent=1 // pred_fallthru
      _
    // Predicated region
    $region38: #{linear_ae_forward.1} parent=1 // pred_check
      _
    $region39: #{linear_ae_forward.1} parent=1 // pred_check_branch
      %90 = sbr.rel (0) target = $region41
    $region40: #{linear_ae_forward.1} parent=1 // pred_region
      %s92 = ssub.s32 1024, 1024
      %93 = vsyncadd [#allocation12], %s92
      %s94 = sshll.u32 [#allocation11], 4
      %s95 = int_to_ptr.vmem [resolvable:$true] %s94
      %100 = dma.hbm_to_vmem [thread:$0]  %s9, 1024, %s95, [#allocation12], 64, 64, 4
    $region41: #{linear_ae_forward.1} parent=1 // pred_fallthru
      _
    // Predicated region
    $region42: #{linear_ae_forward.1} parent=1 // pred_check
      _
    $region43: #{linear_ae_forward.1} parent=1 // pred_check_branch
      %102 = sbr.rel (0) target = $region45
    $region44: #{linear_ae_forward.1} parent=1 // pred_region
      _
    $region45: #{linear_ae_forward.1} parent=1 // pred_fallthru
      _
    // Predicated region
    $region46: #{linear_ae_forward.1} parent=1 // pred_check
      _
    $region47: #{linear_ae_forward.1} parent=1 // pred_check_branch
      %104 = sbr.rel (0) target = $region49
    $region48: #{linear_ae_forward.1} parent=1 // pred_region
      %s106 = ssub.s32 2048, 2048
      %107 = vsyncadd [#allocation12], %s106
      %s108 = sshll.u32 [#allocation13], 4
      %s109 = int_to_ptr.vmem [resolvable:$true] %s108
      %114 = dma.hbm_to_vmem [thread:$0]  %s11, 2048, %s109, [#allocation12], 128, 128, 8
    $region49: #{linear_ae_forward.1} parent=1 // pred_fallthru
      _
    // Predicated region
    $region50: #{linear_ae_forward.1} parent=1 // pred_check
      _
    $region51: #{linear_ae_forward.1} parent=1 // pred_check_branch
      %116 = sbr.rel (0) target = $region53
    $region52: #{linear_ae_forward.1} parent=1 // pred_region
      _
    $region53: #{linear_ae_forward.1} parent=1 // pred_fallthru
      _
    // Predicated region
    $region54: #{linear_ae_forward.1} parent=1 // pred_check
      _
    $region55: #{linear_ae_forward.1} parent=1 // pred_check_branch
      %118 = sbr.rel (0) target = $region57
    $region56: #{linear_ae_forward.1} parent=1 // pred_region
      %119 = dma.done [#allocation3], 256
    $region57: #{linear_ae_forward.1} parent=1 // pred_fallthru
      _
    // Predicated region
    $region58: #{linear_ae_forward.1} parent=1 // pred_check
      _
    $region59: #{linear_ae_forward.1} parent=1 // pred_check_branch
      %121 = sbr.rel (0) target = $region61
    $region60: #{linear_ae_forward.1} parent=1 // pred_region
      %122 = dma.done [#allocation6], 2048
    $region61: #{linear_ae_forward.1} parent=1 // pred_fallthru
      _
    // Predicated region
    $region62: #{linear_ae_forward.1} parent=1 // pred_check
      _
    $region63: #{linear_ae_forward.1} parent=1 // pred_check_branch
      %124 = sbr.rel (0) target = $region65
    $region64: #{linear_ae_forward.1} parent=1 // pred_region
      %125 = dma.done [#allocation6], 1024
    $region65: #{linear_ae_forward.1} parent=1 // pred_fallthru
      _
    // Predicated region
    $region66: #{linear_ae_forward.1} parent=1 // pred_check
      _
    $region67: #{linear_ae_forward.1} parent=1 // pred_check_branch
      %127 = sbr.rel (0) target = $region69
    $region68: #{linear_ae_forward.1} parent=1 // pred_region
      %128 = dma.done [#allocation9], 1024
    $region69: #{linear_ae_forward.1} parent=1 // pred_fallthru
      _
    // Predicated region
    $region70: #{linear_ae_forward.1} parent=1 // pred_check
      _
    $region71: #{linear_ae_forward.1} parent=1 // pred_check_branch
      %130 = sbr.rel (0) target = $region73
    $region72: #{linear_ae_forward.1} parent=1 // pred_region
      %131 = dma.done [#allocation9], 1024
    $region73: #{linear_ae_forward.1} parent=1 // pred_fallthru
      _
    // Predicated region
    $region74: #{linear_ae_forward.1} parent=1 // pred_check
      _
    $region75: #{linear_ae_forward.1} parent=1 // pred_check_branch
      %133 = sbr.rel (0) target = $region77
    $region76: #{linear_ae_forward.1} parent=1 // pred_region
      %134 = dma.done [#allocation12], 1024
    $region77: #{linear_ae_forward.1} parent=1 // pred_fallthru
      _
    // Predicated region
    $region78: #{linear_ae_forward.1} parent=1 // pred_check
      _
    $region79: #{linear_ae_forward.1} parent=1 // pred_check_branch
      %136 = sbr.rel (0) target = $region81
    $region80: #{linear_ae_forward.1} parent=1 // pred_region
      %137 = dma.done [#allocation12], 2048
    $region81: #{linear_ae_forward.1} parent=1 // pred_fallthru
      _
    %v139 = vld [vmem:[#allocation2] sm:$0xff]
    %v140 = vld [vmem:[#allocation2 + $0x8] sm:$0xff]
    %v141 = vpack.c.bf16 %v139, %v139
    %v142 = vpack.c.bf16 %v140, %v140
    %v143 = vld [vmem:[#allocation5] sm:$0xf]
    %v144 = vld [vmem:[#allocation5 + $0x4] sm:$0xf]
    %v145 = vld [vmem:[#allocation5 + $0x8] sm:$0xf]
    %v146 = vld [vmem:[#allocation5 + $0xc] sm:$0xf]
    %v147 = vld [vmem:[#allocation5 + $0x10] sm:$0xf]
    %v148 = vld [vmem:[#allocation5 + $0x14] sm:$0xf]
    %v149 = vld [vmem:[#allocation5 + $0x18] sm:$0xf]
    %v150 = vld [vmem:[#allocation5 + $0x1c] sm:$0xf]
    %v151 = vld [vmem:[#allocation5 + $0x20] sm:$0xf]
    %v152 = vld [vmem:[#allocation5 + $0x24] sm:$0xf]
    %v153 = vld [vmem:[#allocation5 + $0x28] sm:$0xf]
    %v154 = vld [vmem:[#allocation5 + $0x2c] sm:$0xf]
    %v155 = vld [vmem:[#allocation5 + $0x30] sm:$0xf]
    %v156 = vld [vmem:[#allocation5 + $0x34] sm:$0xf]
    %v157 = vld [vmem:[#allocation5 + $0x38] sm:$0xf]
    %v158 = vld [vmem:[#allocation5 + $0x3c] sm:$0xf]
    %v159 = vld [vmem:[#allocation5 + $0x40] sm:$0xf]
    %v160 = vld [vmem:[#allocation5 + $0x44] sm:$0xf]
    %v161 = vld [vmem:[#allocation5 + $0x48] sm:$0xf]
    %v162 = vld [vmem:[#allocation5 + $0x4c] sm:$0xf]
    %v163 = vld [vmem:[#allocation5 + $0x50] sm:$0xf]
    %v164 = vld [vmem:[#allocation5 + $0x54] sm:$0xf]
    %v165 = vld [vmem:[#allocation5 + $0x58] sm:$0xf]
    %v166 = vld [vmem:[#allocation5 + $0x5c] sm:$0xf]
    %v167 = vld [vmem:[#allocation5 + $0x60] sm:$0xf]
    %v168 = vld [vmem:[#allocation5 + $0x64] sm:$0xf]
    %v169 = vld [vmem:[#allocation5 + $0x68] sm:$0xf]
    %v170 = vld [vmem:[#allocation5 + $0x6c] sm:$0xf]
    %v171 = vld [vmem:[#allocation5 + $0x70] sm:$0xf]
    %v172 = vld [vmem:[#allocation5 + $0x74] sm:$0xf]
    %v173 = vld [vmem:[#allocation5 + $0x78] sm:$0xf]
    %v174 = vld [vmem:[#allocation5 + $0x7c] sm:$0xf]
    %v175 = vld [vmem:[%s2] sm:$0x1]
    %v177 = vlaneseq
    %v178 = vshrl.u32 %v177, 7
    %v179 = vsub.s32 0, %v178
    %v180 = vrot.slane %v175, %v179
    %v214 = vunpack.c.l.b16 %v143
    %v215 = vunpack.c.l.b16 %v144
    %v216 = vunpack.c.l.b16 %v145
    %v217 = vunpack.c.l.b16 %v146
    %v218 = vunpack.c.l.b16 %v147
    %v219 = vunpack.c.l.b16 %v148
    %v220 = vunpack.c.l.b16 %v149
    %v221 = vunpack.c.l.b16 %v150
    %v222 = vunpack.c.l.b16 %v151
    %v223 = vunpack.c.l.b16 %v152
    %v224 = vunpack.c.l.b16 %v153
    %v225 = vunpack.c.l.b16 %v154
    %v226 = vunpack.c.l.b16 %v155
    %v227 = vunpack.c.l.b16 %v156
    %v228 = vunpack.c.l.b16 %v157
    %v229 = vunpack.c.l.b16 %v158
    %v230 = vunpack.c.l.b16 %v159
    %v231 = vunpack.c.l.b16 %v160
    %v232 = vunpack.c.l.b16 %v161
    %v233 = vunpack.c.l.b16 %v162
    %v234 = vunpack.c.l.b16 %v163
    %v235 = vunpack.c.l.b16 %v164
    %v236 = vunpack.c.l.b16 %v165
    %v237 = vunpack.c.l.b16 %v166
    %v238 = vunpack.c.l.b16 %v167
    %v239 = vunpack.c.l.b16 %v168
    %v240 = vunpack.c.l.b16 %v169
    %v241 = vunpack.c.l.b16 %v170
    %v242 = vunpack.c.l.b16 %v171
    %v243 = vunpack.c.l.b16 %v172
    %v244 = vunpack.c.l.b16 %v173
    %v245 = vunpack.c.l.b16 %v174
    %v246 = vpack.c.b16 %v215, %v214
    %v247 = vpack.c.b16 %v217, %v216
    %v248 = vpack.c.b16 %v219, %v218
    %v249 = vpack.c.b16 %v221, %v220
    %v250 = vpack.c.b16 %v223, %v222
    %v251 = vpack.c.b16 %v225, %v224
    %v252 = vpack.c.b16 %v227, %v226
    %v253 = vpack.c.b16 %v229, %v228
    %v254 = vpack.c.b16 %v231, %v230
    %v255 = vpack.c.b16 %v233, %v232
    %v256 = vpack.c.b16 %v235, %v234
    %v257 = vpack.c.b16 %v237, %v236
    %v258 = vpack.c.b16 %v239, %v238
    %v259 = vpack.c.b16 %v241, %v240
    %v260 = vpack.c.b16 %v243, %v242
    %v261 = vpack.c.b16 %v245, %v244
    %278 = vmatprep.subr.bf16.mxu0 0
    %279 = vmatpush1.bf16.msra.mxu0 %v246
    %280 = vmatprep.subr.bf16.mxu0 0
    %281 = vmatpush1.bf16.msra.mxu0 %v247
    %282 = vmatprep.subr.bf16.mxu0 0
    %283 = vmatpush1.bf16.msra.mxu0 %v248
    %284 = vmatprep.subr.bf16.mxu0 0
    %285 = vmatpush1.bf16.msra.mxu0 %v249
    %286 = vmatprep.subr.bf16.mxu0 0
    %287 = vmatpush1.bf16.msra.mxu0 %v250
    %288 = vmatprep.subr.bf16.mxu0 0
    %289 = vmatpush1.bf16.msra.mxu0 %v251
    %290 = vmatprep.subr.bf16.mxu0 0
    %291 = vmatpush1.bf16.msra.mxu0 %v252
    %292 = vmatprep.subr.bf16.mxu0 0
    %293 = vmatpush1.bf16.msra.mxu0 %v253
    %294 = vmatprep.subr.bf16.mxu0 0
    %295 = vmatpush1.bf16.msra.mxu0 %v254
    %296 = vmatprep.subr.bf16.mxu0 0
    %297 = vmatpush1.bf16.msra.mxu0 %v255
    %298 = vmatprep.subr.bf16.mxu0 0
    %299 = vmatpush1.bf16.msra.mxu0 %v256
    %300 = vmatprep.subr.bf16.mxu0 0
    %301 = vmatpush1.bf16.msra.mxu0 %v257
    %302 = vmatprep.subr.bf16.mxu0 0
    %303 = vmatpush1.bf16.msra.mxu0 %v258
    %304 = vmatprep.subr.bf16.mxu0 0
    %305 = vmatpush1.bf16.msra.mxu0 %v259
    %306 = vmatprep.subr.bf16.mxu0 0
    %307 = vmatpush1.bf16.msra.mxu0 %v260
    %308 = vmatprep.subr.bf16.mxu0 0
    %309 = vmatpush1.bf16.msra.mxu0 %v261
    %310 = vmatprep.mubr.bf16.mxu0 %v142
    %311 = vmatmul.mubr.bf16.gmra.mrb[0].mxu0 %v141
    %v312 = vpop.f32.mrb[0].mxu0
    %v313 = vadd.f32 %v180, %v312
    %v314 = vpop.f32.mrb[0].mxu0
    %v315 = vpop.f32.mrb[0].mxu0
    %v316 = vpop.f32.mrb[0].mxu0
    %317 = vdwg.mxu0
    %v318 = vmax.f32 %v313, 0.0
    %v319 = vpack.c.bf16 %v318, %v318
    %v320 = vld [vmem:[#allocation7] sm:$0xf]
    %v321 = vld [vmem:[#allocation7 + $0x4] sm:$0xf]
    %v322 = vld [vmem:[#allocation7 + $0x8] sm:$0xf]
    %v323 = vld [vmem:[#allocation7 + $0xc] sm:$0xf]
    %v324 = vld [vmem:[#allocation7 + $0x10] sm:$0xf]
    %v325 = vld [vmem:[#allocation7 + $0x14] sm:$0xf]
    %v326 = vld [vmem:[#allocation7 + $0x18] sm:$0xf]
    %v327 = vld [vmem:[#allocation7 + $0x1c] sm:$0xf]
    %v328 = vld [vmem:[#allocation7 + $0x20] sm:$0xf]
    %v329 = vld [vmem:[#allocation7 + $0x24] sm:$0xf]
    %v330 = vld [vmem:[#allocation7 + $0x28] sm:$0xf]
    %v331 = vld [vmem:[#allocation7 + $0x2c] sm:$0xf]
    %v332 = vld [vmem:[#allocation7 + $0x30] sm:$0xf]
    %v333 = vld [vmem:[#allocation7 + $0x34] sm:$0xf]
    %v334 = vld [vmem:[#allocation7 + $0x38] sm:$0xf]
    %v335 = vld [vmem:[#allocation7 + $0x3c] sm:$0xf]
    %v336 = vld [vmem:[%s4] sm:$0x1]
    %v338 = vlaneseq
    %v339 = vshrl.u32 %v338, 7
    %v340 = vsub.s32 0, %v339
    %v341 = vrot.slane %v336, %v340
    %v359 = vunpack.c.l.b16 %v320
    %v360 = vunpack.c.l.b16 %v321
    %v361 = vunpack.c.l.b16 %v322
    %v362 = vunpack.c.l.b16 %v323
    %v363 = vunpack.c.l.b16 %v324
    %v364 = vunpack.c.l.b16 %v325
    %v365 = vunpack.c.l.b16 %v326
    %v366 = vunpack.c.l.b16 %v327
    %v367 = vunpack.c.l.b16 %v328
    %v368 = vunpack.c.l.b16 %v329
    %v369 = vunpack.c.l.b16 %v330
    %v370 = vunpack.c.l.b16 %v331
    %v371 = vunpack.c.l.b16 %v332
    %v372 = vunpack.c.l.b16 %v333
    %v373 = vunpack.c.l.b16 %v334
    %v374 = vunpack.c.l.b16 %v335
    %v375 = vpack.c.b16 %v360, %v359
    %v376 = vpack.c.b16 %v362, %v361
    %v377 = vpack.c.b16 %v364, %v363
    %v378 = vpack.c.b16 %v366, %v365
    %v379 = vpack.c.b16 %v368, %v367
    %v380 = vpack.c.b16 %v370, %v369
    %v381 = vpack.c.b16 %v372, %v371
    %v382 = vpack.c.b16 %v374, %v373
    %391 = vmatprep.subr.bf16.mxu0 0
    %392 = vmatpush1.bf16.msra.mxu0 %v375
    %393 = vmatprep.subr.bf16.mxu0 0
    %394 = vmatpush1.bf16.msra.mxu0 %v376
    %395 = vmatprep.subr.bf16.mxu0 0
    %396 = vmatpush1.bf16.msra.mxu0 %v377
    %397 = vmatprep.subr.bf16.mxu0 0
    %398 = vmatpush1.bf16.msra.mxu0 %v378
    %399 = vmatprep.subr.bf16.mxu0 0
    %400 = vmatpush1.bf16.msra.mxu0 %v379
    %401 = vmatprep.subr.bf16.mxu0 0
    %402 = vmatpush1.bf16.msra.mxu0 %v380
    %403 = vmatprep.subr.bf16.mxu0 0
    %404 = vmatpush1.bf16.msra.mxu0 %v381
    %405 = vmatprep.subr.bf16.mxu0 0
    %406 = vmatpush1.bf16.msra.mxu0 %v382
    %407 = vmatprep.subr.bf16.mxu0 0
    %408 = vmatpush1.bf16.msra.mxu0 0
    %409 = vmatprep.subr.bf16.mxu0 0
    %410 = vmatpush1.bf16.msra.mxu0 0
    %411 = vmatprep.subr.bf16.mxu0 0
    %412 = vmatpush1.bf16.msra.mxu0 0
    %413 = vmatprep.subr.bf16.mxu0 0
    %414 = vmatpush1.bf16.msra.mxu0 0
    %415 = vmatprep.subr.bf16.mxu0 0
    %416 = vmatpush1.bf16.msra.mxu0 0
    %417 = vmatprep.subr.bf16.mxu0 0
    %418 = vmatpush1.bf16.msra.mxu0 0
    %419 = vmatprep.subr.bf16.mxu0 0
    %420 = vmatpush1.bf16.msra.mxu0 0
    %421 = vmatprep.subr.bf16.mxu0 0
    %422 = vmatpush1.bf16.msra.mxu0 0
    %423 = vmatprep.mubr.bf16.mxu0 0
    %424 = vmatmul.mubr.bf16.gmra.mrb[0].mxu0 %v319
    %v425 = vpop.f32.mrb[0].mxu0
    %v426 = vadd.f32 %v341, %v425
    %v427 = vpop.f32.mrb[0].mxu0
    %v428 = vpop.f32.mrb[0].mxu0
    %v429 = vpop.f32.mrb[0].mxu0
    %430 = vdwg.mxu0
    %v431 = vmax.f32 %v426, 0.0
    %v432 = vpack.c.bf16 %v431, %v431
    %v433 = vld [vmem:[#allocation8] sm:$0xf]
    %v434 = vld [vmem:[#allocation8 + $0x4] sm:$0xf]
    %v435 = vld [vmem:[#allocation8 + $0x8] sm:$0xf]
    %v436 = vld [vmem:[#allocation8 + $0xc] sm:$0xf]
    %v437 = vld [vmem:[#allocation8 + $0x10] sm:$0xf]
    %v438 = vld [vmem:[#allocation8 + $0x14] sm:$0xf]
    %v439 = vld [vmem:[#allocation8 + $0x18] sm:$0xf]
    %v440 = vld [vmem:[#allocation8 + $0x1c] sm:$0xf]
    %v441 = vld [vmem:[#allocation8 + $0x20] sm:$0xf]
    %v442 = vld [vmem:[#allocation8 + $0x24] sm:$0xf]
    %v443 = vld [vmem:[#allocation8 + $0x28] sm:$0xf]
    %v444 = vld [vmem:[#allocation8 + $0x2c] sm:$0xf]
    %v445 = vld [vmem:[#allocation8 + $0x30] sm:$0xf]
    %v446 = vld [vmem:[#allocation8 + $0x34] sm:$0xf]
    %v447 = vld [vmem:[#allocation8 + $0x38] sm:$0xf]
    %v448 = vld [vmem:[#allocation8 + $0x3c] sm:$0xf]
    %v449 = vld [vmem:[%s6] sm:$0x1]
    %v451 = vlaneseq
    %v452 = vshrl.u32 %v451, 7
    %v453 = vsub.s32 0, %v452
    %v454 = vrot.slane %v449, %v453
    %v472 = vunpack.c.l.b16 %v433
    %v473 = vunpack.c.l.b16 %v434
    %v474 = vunpack.c.l.b16 %v435
    %v475 = vunpack.c.l.b16 %v436
    %v476 = vunpack.c.l.b16 %v437
    %v477 = vunpack.c.l.b16 %v438
    %v478 = vunpack.c.l.b16 %v439
    %v479 = vunpack.c.l.b16 %v440
    %v480 = vunpack.c.l.b16 %v441
    %v481 = vunpack.c.l.b16 %v442
    %v482 = vunpack.c.l.b16 %v443
    %v483 = vunpack.c.l.b16 %v444
    %v484 = vunpack.c.l.b16 %v445
    %v485 = vunpack.c.l.b16 %v446
    %v486 = vunpack.c.l.b16 %v447
    %v487 = vunpack.c.l.b16 %v448
    %v488 = vpack.c.b16 %v473, %v472
    %v489 = vpack.c.b16 %v475, %v474
    %v490 = vpack.c.b16 %v477, %v476
    %v491 = vpack.c.b16 %v479, %v478
    %v492 = vpack.c.b16 %v481, %v480
    %v493 = vpack.c.b16 %v483, %v482
    %v494 = vpack.c.b16 %v485, %v484
    %v495 = vpack.c.b16 %v487, %v486
    %504 = vmatprep.subr.bf16.mxu0 0
    %505 = vmatpush1.bf16.msra.mxu0 %v488
    %506 = vmatprep.subr.bf16.mxu0 0
    %507 = vmatpush1.bf16.msra.mxu0 %v489
    %508 = vmatprep.subr.bf16.mxu0 0
    %509 = vmatpush1.bf16.msra.mxu0 %v490
    %510 = vmatprep.subr.bf16.mxu0 0
    %511 = vmatpush1.bf16.msra.mxu0 %v491
    %512 = vmatprep.subr.bf16.mxu0 0
    %513 = vmatpush1.bf16.msra.mxu0 %v492
    %514 = vmatprep.subr.bf16.mxu0 0
    %515 = vmatpush1.bf16.msra.mxu0 %v493
    %516 = vmatprep.subr.bf16.mxu0 0
    %517 = vmatpush1.bf16.msra.mxu0 %v494
    %518 = vmatprep.subr.bf16.mxu0 0
    %519 = vmatpush1.bf16.msra.mxu0 %v495
    %520 = vmatprep.subr.bf16.mxu0 0
    %521 = vmatpush1.bf16.msra.mxu0 0
    %522 = vmatprep.subr.bf16.mxu0 0
    %523 = vmatpush1.bf16.msra.mxu0 0
    %524 = vmatprep.subr.bf16.mxu0 0
    %525 = vmatpush1.bf16.msra.mxu0 0
    %526 = vmatprep.subr.bf16.mxu0 0
    %527 = vmatpush1.bf16.msra.mxu0 0
    %528 = vmatprep.subr.bf16.mxu0 0
    %529 = vmatpush1.bf16.msra.mxu0 0
    %530 = vmatprep.subr.bf16.mxu0 0
    %531 = vmatpush1.bf16.msra.mxu0 0
    %532 = vmatprep.subr.bf16.mxu0 0
    %533 = vmatpush1.bf16.msra.mxu0 0
    %534 = vmatprep.subr.bf16.mxu0 0
    %535 = vmatpush1.bf16.msra.mxu0 0
    %536 = vmatprep.mubr.bf16.mxu0 0
    %537 = vmatmul.mubr.bf16.gmra.mrb[0].mxu0 %v432
    %v538 = vpop.f32.mrb[0].mxu0
    %v539 = vadd.f32 %v454, %v538
    %v540 = vpop.f32.mrb[0].mxu0
    %v541 = vpop.f32.mrb[0].mxu0
    %v542 = vpop.f32.mrb[0].mxu0
    %543 = vdwg.mxu0
    %v544 = vmax.f32 %v539, 0.0
    %v545 = vpack.c.bf16 %v544, %v544
    %v546 = vld [vmem:[#allocation10] sm:$0xf]
    %v547 = vld [vmem:[#allocation10 + $0x4] sm:$0xf]
    %v548 = vld [vmem:[#allocation10 + $0x8] sm:$0xf]
    %v549 = vld [vmem:[#allocation10 + $0xc] sm:$0xf]
    %v550 = vld [vmem:[#allocation10 + $0x10] sm:$0xf]
    %v551 = vld [vmem:[#allocation10 + $0x14] sm:$0xf]
    %v552 = vld [vmem:[#allocation10 + $0x18] sm:$0xf]
    %v553 = vld [vmem:[#allocation10 + $0x1c] sm:$0xf]
    %v554 = vld [vmem:[#allocation10 + $0x20] sm:$0xf]
    %v555 = vld [vmem:[#allocation10 + $0x24] sm:$0xf]
    %v556 = vld [vmem:[#allocation10 + $0x28] sm:$0xf]
    %v557 = vld [vmem:[#allocation10 + $0x2c] sm:$0xf]
    %v558 = vld [vmem:[#allocation10 + $0x30] sm:$0xf]
    %v559 = vld [vmem:[#allocation10 + $0x34] sm:$0xf]
    %v560 = vld [vmem:[#allocation10 + $0x38] sm:$0xf]
    %v561 = vld [vmem:[#allocation10 + $0x3c] sm:$0xf]
    %v562 = vld [vmem:[%s8] sm:$0x1]
    %v564 = vlaneseq
    %v565 = vshrl.u32 %v564, 7
    %v566 = vsub.s32 0, %v565
    %v567 = vrot.slane %v562, %v566
    %v585 = vunpack.c.l.b16 %v546
    %v586 = vunpack.c.l.b16 %v547
    %v587 = vunpack.c.l.b16 %v548
    %v588 = vunpack.c.l.b16 %v549
    %v589 = vunpack.c.l.b16 %v550
    %v590 = vunpack.c.l.b16 %v551
    %v591 = vunpack.c.l.b16 %v552
    %v592 = vunpack.c.l.b16 %v553
    %v593 = vunpack.c.l.b16 %v554
    %v594 = vunpack.c.l.b16 %v555
    %v595 = vunpack.c.l.b16 %v556
    %v596 = vunpack.c.l.b16 %v557
    %v597 = vunpack.c.l.b16 %v558
    %v598 = vunpack.c.l.b16 %v559
    %v599 = vunpack.c.l.b16 %v560
    %v600 = vunpack.c.l.b16 %v561
    %v601 = vpack.c.b16 %v586, %v585
    %v602 = vpack.c.b16 %v588, %v587
    %v603 = vpack.c.b16 %v590, %v589
    %v604 = vpack.c.b16 %v592, %v591
    %v605 = vpack.c.b16 %v594, %v593
    %v606 = vpack.c.b16 %v596, %v595
    %v607 = vpack.c.b16 %v598, %v597
    %v608 = vpack.c.b16 %v600, %v599
    %617 = vmatprep.subr.bf16.mxu0 0
    %618 = vmatpush1.bf16.msra.mxu0 %v601
    %619 = vmatprep.subr.bf16.mxu0 0
    %620 = vmatpush1.bf16.msra.mxu0 %v602
    %621 = vmatprep.subr.bf16.mxu0 0
    %622 = vmatpush1.bf16.msra.mxu0 %v603
    %623 = vmatprep.subr.bf16.mxu0 0
    %624 = vmatpush1.bf16.msra.mxu0 %v604
    %625 = vmatprep.subr.bf16.mxu0 0
    %626 = vmatpush1.bf16.msra.mxu0 %v605
    %627 = vmatprep.subr.bf16.mxu0 0
    %628 = vmatpush1.bf16.msra.mxu0 %v606
    %629 = vmatprep.subr.bf16.mxu0 0
    %630 = vmatpush1.bf16.msra.mxu0 %v607
    %631 = vmatprep.subr.bf16.mxu0 0
    %632 = vmatpush1.bf16.msra.mxu0 %v608
    %633 = vmatprep.subr.bf16.mxu0 0
    %634 = vmatpush1.bf16.msra.mxu0 0
    %635 = vmatprep.subr.bf16.mxu0 0
    %636 = vmatpush1.bf16.msra.mxu0 0
    %637 = vmatprep.subr.bf16.mxu0 0
    %638 = vmatpush1.bf16.msra.mxu0 0
    %639 = vmatprep.subr.bf16.mxu0 0
    %640 = vmatpush1.bf16.msra.mxu0 0
    %641 = vmatprep.subr.bf16.mxu0 0
    %642 = vmatpush1.bf16.msra.mxu0 0
    %643 = vmatprep.subr.bf16.mxu0 0
    %644 = vmatpush1.bf16.msra.mxu0 0
    %645 = vmatprep.subr.bf16.mxu0 0
    %646 = vmatpush1.bf16.msra.mxu0 0
    %647 = vmatprep.subr.bf16.mxu0 0
    %648 = vmatpush1.bf16.msra.mxu0 0
    %649 = vmatprep.mubr.bf16.mxu0 0
    %650 = vmatmul.mubr.bf16.gmra.mrb[0].mxu0 %v545
    %v651 = vpop.f32.mrb[0].mxu0
    %v652 = vadd.f32 %v567, %v651
    %v653 = vpop.f32.mrb[0].mxu0
    %v654 = vpop.f32.mrb[0].mxu0
    %v655 = vpop.f32.mrb[0].mxu0
    %656 = vdwg.mxu0
    %v657 = vmax.f32 %v652, 0.0
    %v658 = vpack.c.bf16 %v657, %v657
    %v659 = vld [vmem:[#allocation11] sm:$0xf]
    %v660 = vld [vmem:[#allocation11 + $0x4] sm:$0xf]
    %v661 = vld [vmem:[#allocation11 + $0x8] sm:$0xf]
    %v662 = vld [vmem:[#allocation11 + $0xc] sm:$0xf]
    %v663 = vld [vmem:[#allocation11 + $0x10] sm:$0xf]
    %v664 = vld [vmem:[#allocation11 + $0x14] sm:$0xf]
    %v665 = vld [vmem:[#allocation11 + $0x18] sm:$0xf]
    %v666 = vld [vmem:[#allocation11 + $0x1c] sm:$0xf]
    %v667 = vld [vmem:[#allocation11 + $0x20] sm:$0xf]
    %v668 = vld [vmem:[#allocation11 + $0x24] sm:$0xf]
    %v669 = vld [vmem:[#allocation11 + $0x28] sm:$0xf]
    %v670 = vld [vmem:[#allocation11 + $0x2c] sm:$0xf]
    %v671 = vld [vmem:[#allocation11 + $0x30] sm:$0xf]
    %v672 = vld [vmem:[#allocation11 + $0x34] sm:$0xf]
    %v673 = vld [vmem:[#allocation11 + $0x38] sm:$0xf]
    %v674 = vld [vmem:[#allocation11 + $0x3c] sm:$0xf]
    %v675 = vld [vmem:[%s10] sm:$0x1]
    %v677 = vlaneseq
    %v678 = vshrl.u32 %v677, 7
    %v679 = vsub.s32 0, %v678
    %v680 = vrot.slane %v675, %v679
    %v698 = vunpack.c.l.b16 %v659
    %v699 = vunpack.c.l.b16 %v660
    %v700 = vunpack.c.l.b16 %v661
    %v701 = vunpack.c.l.b16 %v662
    %v702 = vunpack.c.l.b16 %v663
    %v703 = vunpack.c.l.b16 %v664
    %v704 = vunpack.c.l.b16 %v665
    %v705 = vunpack.c.l.b16 %v666
    %v706 = vunpack.c.l.b16 %v667
    %v707 = vunpack.c.l.b16 %v668
    %v708 = vunpack.c.l.b16 %v669
    %v709 = vunpack.c.l.b16 %v670
    %v710 = vunpack.c.l.b16 %v671
    %v711 = vunpack.c.l.b16 %v672
    %v712 = vunpack.c.l.b16 %v673
    %v713 = vunpack.c.l.b16 %v674
    %v714 = vpack.c.b16 %v699, %v698
    %v715 = vpack.c.b16 %v701, %v700
    %v716 = vpack.c.b16 %v703, %v702
    %v717 = vpack.c.b16 %v705, %v704
    %v718 = vpack.c.b16 %v707, %v706
    %v719 = vpack.c.b16 %v709, %v708
    %v720 = vpack.c.b16 %v711, %v710
    %v721 = vpack.c.b16 %v713, %v712
    %730 = vmatprep.subr.bf16.mxu0 0
    %731 = vmatpush1.bf16.msra.mxu0 %v714
    %732 = vmatprep.subr.bf16.mxu0 0
    %733 = vmatpush1.bf16.msra.mxu0 %v715
    %734 = vmatprep.subr.bf16.mxu0 0
    %735 = vmatpush1.bf16.msra.mxu0 %v716
    %736 = vmatprep.subr.bf16.mxu0 0
    %737 = vmatpush1.bf16.msra.mxu0 %v717
    %738 = vmatprep.subr.bf16.mxu0 0
    %739 = vmatpush1.bf16.msra.mxu0 %v718
    %740 = vmatprep.subr.bf16.mxu0 0
    %741 = vmatpush1.bf16.msra.mxu0 %v719
    %742 = vmatprep.subr.bf16.mxu0 0
    %743 = vmatpush1.bf16.msra.mxu0 %v720
    %744 = vmatprep.subr.bf16.mxu0 0
    %745 = vmatpush1.bf16.msra.mxu0 %v721
    %746 = vmatprep.subr.bf16.mxu0 0
    %747 = vmatpush1.bf16.msra.mxu0 0
    %748 = vmatprep.subr.bf16.mxu0 0
    %749 = vmatpush1.bf16.msra.mxu0 0
    %750 = vmatprep.subr.bf16.mxu0 0
    %751 = vmatpush1.bf16.msra.mxu0 0
    %752 = vmatprep.subr.bf16.mxu0 0
    %753 = vmatpush1.bf16.msra.mxu0 0
    %754 = vmatprep.subr.bf16.mxu0 0
    %755 = vmatpush1.bf16.msra.mxu0 0
    %756 = vmatprep.subr.bf16.mxu0 0
    %757 = vmatpush1.bf16.msra.mxu0 0
    %758 = vmatprep.subr.bf16.mxu0 0
    %759 = vmatpush1.bf16.msra.mxu0 0
    %760 = vmatprep.subr.bf16.mxu0 0
    %761 = vmatpush1.bf16.msra.mxu0 0
    %762 = vmatprep.mubr.bf16.mxu0 0
    %763 = vmatmul.mubr.bf16.gmra.mrb[0].mxu0 %v658
    %v764 = vpop.f32.mrb[0].mxu0
    %v765 = vadd.f32 %v680, %v764
    %v766 = vpop.f32.mrb[0].mxu0
    %v767 = vpop.f32.mrb[0].mxu0
    %v768 = vpop.f32.mrb[0].mxu0
    %769 = vdwg.mxu0
    %v770 = vmax.f32 %v765, 0.0
    %v771 = vpack.c.bf16 %v770, %v770
    %v772 = vld [vmem:[#allocation13] sm:$0xff]
    %v773 = vld [vmem:[#allocation13 + $0x8] sm:$0xff]
    %v774 = vld [vmem:[#allocation13 + $0x10] sm:$0xff]
    %v775 = vld [vmem:[#allocation13 + $0x18] sm:$0xff]
    %v776 = vld [vmem:[#allocation13 + $0x20] sm:$0xff]
    %v777 = vld [vmem:[#allocation13 + $0x28] sm:$0xff]
    %v778 = vld [vmem:[#allocation13 + $0x30] sm:$0xff]
    %v779 = vld [vmem:[#allocation13 + $0x38] sm:$0xff]
    %v780 = vld [vmem:[#allocation13 + $0x40] sm:$0xff]
    %v781 = vld [vmem:[#allocation13 + $0x48] sm:$0xff]
    %v782 = vld [vmem:[#allocation13 + $0x50] sm:$0xff]
    %v783 = vld [vmem:[#allocation13 + $0x58] sm:$0xff]
    %v784 = vld [vmem:[#allocation13 + $0x60] sm:$0xff]
    %v785 = vld [vmem:[#allocation13 + $0x68] sm:$0xff]
    %v786 = vld [vmem:[#allocation13 + $0x70] sm:$0xff]
    %v787 = vld [vmem:[#allocation13 + $0x78] sm:$0xff]
    %v788 = vld [vmem:[%s12] sm:$0x3]
    %v790 = vlaneseq
    %v791 = vshrl.u32 %v790, 7
    %v792 = vsub.s32 0, %v791
    %v793 = vrot.slane %v788, %v792
    %v794 = vlaneseq
    %v795 = vshrl.u32 %v794, 7
    %v796 = vsub.s32 1, %v795
    %v797 = vrot.slane %v788, %v796
    %v816 = vunpack.c.l.b16 %v772
    %v817 = vunpack.c.h.b16 %v772
    %v818 = vunpack.c.l.b16 %v773
    %v819 = vunpack.c.h.b16 %v773
    %v820 = vunpack.c.l.b16 %v774
    %v821 = vunpack.c.h.b16 %v774
    %v822 = vunpack.c.l.b16 %v775
    %v823 = vunpack.c.h.b16 %v775
    %v824 = vunpack.c.l.b16 %v776
    %v825 = vunpack.c.h.b16 %v776
    %v826 = vunpack.c.l.b16 %v777
    %v827 = vunpack.c.h.b16 %v777
    %v828 = vunpack.c.l.b16 %v778
    %v829 = vunpack.c.h.b16 %v778
    %v830 = vunpack.c.l.b16 %v779
    %v831 = vunpack.c.h.b16 %v779
    %v832 = vunpack.c.l.b16 %v780
    %v833 = vunpack.c.h.b16 %v780
    %v834 = vunpack.c.l.b16 %v781
    %v835 = vunpack.c.h.b16 %v781
    %v836 = vunpack.c.l.b16 %v782
    %v837 = vunpack.c.h.b16 %v782
    %v838 = vunpack.c.l.b16 %v783
    %v839 = vunpack.c.h.b16 %v783
    %v840 = vunpack.c.l.b16 %v784
    %v841 = vunpack.c.h.b16 %v784
    %v842 = vunpack.c.l.b16 %v785
    %v843 = vunpack.c.h.b16 %v785
    %v844 = vunpack.c.l.b16 %v786
    %v845 = vunpack.c.h.b16 %v786
    %v846 = vunpack.c.l.b16 %v787
    %v847 = vunpack.c.h.b16 %v787
    %v848 = vpack.c.b16 %v818, %v816
    %v849 = vpack.c.b16 %v819, %v817
    %v850 = vpack.c.b16 %v822, %v820
    %v851 = vpack.c.b16 %v823, %v821
    %v852 = vpack.c.b16 %v826, %v824
    %v853 = vpack.c.b16 %v827, %v825
    %v854 = vpack.c.b16 %v830, %v828
    %v855 = vpack.c.b16 %v831, %v829
    %v856 = vpack.c.b16 %v834, %v832
    %v857 = vpack.c.b16 %v835, %v833
    %v858 = vpack.c.b16 %v838, %v836
    %v859 = vpack.c.b16 %v839, %v837
    %v860 = vpack.c.b16 %v842, %v840
    %v861 = vpack.c.b16 %v843, %v841
    %v862 = vpack.c.b16 %v846, %v844
    %v863 = vpack.c.b16 %v847, %v845
    %880 = vmatprep.subr.bf16.mxu0 %v849
    %881 = vmatpush1.bf16.msra.mxu0 %v848
    %882 = vmatprep.subr.bf16.mxu0 %v851
    %883 = vmatpush1.bf16.msra.mxu0 %v850
    %884 = vmatprep.subr.bf16.mxu0 %v853
    %885 = vmatpush1.bf16.msra.mxu0 %v852
    %886 = vmatprep.subr.bf16.mxu0 %v855
    %887 = vmatpush1.bf16.msra.mxu0 %v854
    %888 = vmatprep.subr.bf16.mxu0 %v857
    %889 = vmatpush1.bf16.msra.mxu0 %v856
    %890 = vmatprep.subr.bf16.mxu0 %v859
    %891 = vmatpush1.bf16.msra.mxu0 %v858
    %892 = vmatprep.subr.bf16.mxu0 %v861
    %893 = vmatpush1.bf16.msra.mxu0 %v860
    %894 = vmatprep.subr.bf16.mxu0 %v863
    %895 = vmatpush1.bf16.msra.mxu0 %v862
    %896 = vmatprep.subr.bf16.mxu0 0
    %897 = vmatpush1.bf16.msra.mxu0 0
    %898 = vmatprep.subr.bf16.mxu0 0
    %899 = vmatpush1.bf16.msra.mxu0 0
    %900 = vmatprep.subr.bf16.mxu0 0
    %901 = vmatpush1.bf16.msra.mxu0 0
    %902 = vmatprep.subr.bf16.mxu0 0
    %903 = vmatpush1.bf16.msra.mxu0 0
    %904 = vmatprep.subr.bf16.mxu0 0
    %905 = vmatpush1.bf16.msra.mxu0 0
    %906 = vmatprep.subr.bf16.mxu0 0
    %907 = vmatpush1.bf16.msra.mxu0 0
    %908 = vmatprep.subr.bf16.mxu0 0
    %909 = vmatpush1.bf16.msra.mxu0 0
    %910 = vmatprep.subr.bf16.mxu0 0
    %911 = vmatpush1.bf16.msra.mxu0 0
    %912 = vmatprep.mubr.bf16.mxu0 0
    %913 = vmatmul.mubr.bf16.gmra.mrb[0].mxu0 %v771
    %v914 = vpop.f32.mrb[0].mxu0
    %v915 = vadd.f32 %v793, %v914
    %v916 = vpop.f32.mrb[0].mxu0
    %v917 = vadd.f32 %v797, %v916
    %v918 = vpop.f32.mrb[0].mxu0
    %v919 = vpop.f32.mrb[0].mxu0
    %920 = vdwg.mxu0
    %v921 = vsub.f32 0.0, %v915
    %v922 = vsub.f32 0.0, %v917
    %v923 = vmul.f32 %v921, 1.442695
    %v924 = vpow.pop %v923
    %v925 = vmul.f32 %v922, 1.442695
    %v926 = vpow.pop %v925
    %v927 = vadd.f32 %v924, 1.0
    %v928 = vadd.f32 %v926, 1.0
    %v929 = vrcp.pop %v927
    %v930 = vrcp.pop %v928
    %931 = vst [vmem:[#allocation14] sm:$0xff] %v929
    %932 = vst [vmem:[#allocation14 + $0x8] sm:$0xff] %v930
    // Predicated region
    $region82: #{linear_ae_forward.1} parent=1 // pred_check
      _
    $region83: #{linear_ae_forward.1} parent=1 // pred_check_branch
      %934 = sbr.rel (0) target = $region85
    $region84: #{linear_ae_forward.1} parent=1 // pred_region
      %s936 = ssub.s32 256, 256
      %937 = vsyncadd [#allocation4], %s936
      %s939 = sshll.u32 [#allocation14], 4
      %s940 = int_to_ptr.vmem [resolvable:$true] %s939
      %942 = dma.vmem_to_hbm [thread:$0]  %s940, 256, %s13, [#allocation4]
    $region85: #{linear_ae_forward.1} parent=1 // pred_fallthru
      _
    // Predicated region
    $region86: #{linear_ae_forward.1} parent=1 // pred_check
      _
    $region87: #{linear_ae_forward.1} parent=1 // pred_check_branch
      %944 = sbr.rel (0) target = $region89
    $region88: #{linear_ae_forward.1} parent=1 // pred_region
      %945 = dma.done [#allocation4], 256
    $region89: #{linear_ae_forward.1} parent=1 // pred_fallthru
      _
    %946 = vsyncpa [#allocation3], 1
    %947 = vsyncpa [#allocation6], 1
    %948 = vsyncpa [#allocation9], 1
    %949 = vsyncpa [#allocation12], 1
    %950 = vsyncpa [#allocation4], 1

</llo_original>
